<compile_context>
chip_gen: v6e
topology: v6e:2x2x1
jax: 0.10.0
libtpu: 0.0.40
codegen_flags: <defaults>
</compile_context>

<pallas_src>
import jax
import jax.numpy as jnp
from jax.experimental import pallas as pl
from jax.experimental.pallas import tpu as pltpu


# ---------------------------------------------------------------------------
# Kernels
# ---------------------------------------------------------------------------

def _hidden(x_ref, w1_ref, b1_ref):
    # f32 MXU matmul + f32 bias + ReLU (lane-dense: hidden padded to 128)
    x = x_ref[...].astype(jnp.float32)
    h = jnp.dot(x, w1_ref[...], preferred_element_type=jnp.float32) + b1_ref[...]
    return jnp.maximum(h, 0.0)


def confidence_beta_kernel(x_ref, w1_ref, b1_ref, w2_ref, b2_ref, o_ref):
    h = _hidden(x_ref, w1_ref, b1_ref)                                   # (TB, Hp) f32
    z = jnp.dot(h, w2_ref[...], preferred_element_type=jnp.float32) \
        + b2_ref[...]                                                     # (TB, 2) f32
    # numerically stable softplus
    p = jnp.maximum(z, 0.0) + jnp.log(1.0 + jnp.exp(-jnp.abs(z)))
    alpha = p[:, 0:1] + 1.0                                               # (TB, 1)
    beta = p[:, 1:2] + 1.0
    s = alpha + beta
    inv_s = 1.0 / s
    confidence = alpha * inv_s
    variance = alpha * beta * inv_s * inv_s / (s + 1.0)
    uncertainty = jnp.sqrt(variance)
    # Pack [confidence, alpha, beta, uncertainty] into lanes 0..3 of the output
    # tile via iota+select (robust lowering; avoids width-1 lane concat).
    col = jax.lax.broadcasted_iota(jnp.int32, o_ref.shape, 1)
    packed = jnp.where(col == 0, confidence,
             jnp.where(col == 1, alpha,
             jnp.where(col == 2, beta, uncertainty)))
    o_ref[...] = packed.astype(o_ref.dtype)


def confidence_sigmoid_kernel(x_ref, w1_ref, b1_ref, w2_ref, b2_ref, o_ref):
    h = _hidden(x_ref, w1_ref, b1_ref)
    z = jnp.dot(h, w2_ref[...], preferred_element_type=jnp.float32) \
        + b2_ref[...]                                                     # (TB, 1)
    o_ref[...] = (1.0 / (1.0 + jnp.exp(-z))).astype(o_ref.dtype)


# ---------------------------------------------------------------------------
# Wrapper
# ---------------------------------------------------------------------------

def _pick_batch_tile(B, D, itemsize, batch_tile=None):
    """D-adaptive batch tile: ~2 MiB of x per tile, multiple of 8, >=2 tiles
    when B >= 16 (so v7x's two TensorCores both get work)."""
    if B <= 8:
        return B                                   # single full-array block
    if batch_tile is not None:
        tb = int(batch_tile)
    else:
        tb = (2 * 1024 * 1024) // max(1, D * itemsize)
    tb = min(tb, 8192)
    if B >= 16:
        tb = min(tb, max(8, (B // 2) // 8 * 8))    # at least 2 grid steps
    tb = max(8, (min(tb, B) // 8) * 8)             # multiple of 8
    return tb


def _mlp_call(kernel, x, w1, b1, w2, b2, out_cols, batch_tile=None):
    B, D = x.shape
    H = w1.shape[1]
    head_cols = w2.shape[1]                        # 2 (beta) or 1 (sigmoid)

    # Zero-pad the hidden width to a multiple of 128 (lane-dense h / bias / ReLU).
    # ReLU(0 + 0) = 0 and the padded W2 rows are 0, so results are unchanged.
    hp = 128 * pl.cdiv(H, 128)
    w1p = w1.astype(jnp.float32)
    b1p = b1.astype(jnp.float32)
    w2p = w2.astype(jnp.float32)
    if hp != H:
        w1p = jnp.pad(w1p, ((0, 0), (0, hp - H)))
        b1p = jnp.pad(b1p, (0, hp - H))
        w2p = jnp.pad(w2p, ((0, hp - H), (0, 0)))
    b1_2d = b1p.reshape(1, hp)
    b2_2d = b2.reshape(1, head_cols).astype(jnp.float32)

    tb = _pick_batch_tile(B, D, x.dtype.itemsize, batch_tile)
    grid = (pl.cdiv(B, tb),)                       # ragged last block is masked

    return pl.pallas_call(
        kernel,
        out_shape=jax.ShapeDtypeStruct((B, out_cols), jnp.float32),
        grid_spec=pltpu.PrefetchScalarGridSpec(
            num_scalar_prefetch=0,
            grid=grid,
            in_specs=[
                pl.BlockSpec((tb, D), lambda i: (i, 0)),            # x: tiled on batch
                pl.BlockSpec((D, hp), lambda i: (0, 0)),            # W1: VMEM-resident
                pl.BlockSpec((1, hp), lambda i: (0, 0)),            # b1: resident
                pl.BlockSpec((hp, head_cols), lambda i: (0, 0)),    # W2: resident
                pl.BlockSpec((1, head_cols), lambda i: (0, 0)),     # b2: resident
            ],
            out_specs=pl.BlockSpec((tb, out_cols), lambda i: (i, 0)),
        ),
        compiler_params=pltpu.CompilerParams(
            dimension_semantics=("parallel",),     # shard batch tiles across TCs
            vmem_limit_bytes=32 * 1024 * 1024,     # safe on v5e / v6e / v7x
        ),
    )(x, w1p, b1_2d, w2p, b2_2d)


def confidence_head_forward(x, params, use_beta=True, batch_tile=None):
    """x: (B, input_dim); params = (w1 (D,H), b1 (H,), w2 (H, 2 or 1), b2)."""
    w1, b1, w2, b2 = params
    if use_beta:
        packed = _mlp_call(confidence_beta_kernel, x, w1, b1, w2, b2,
                           out_cols=4, batch_tile=batch_tile)
        return {
            "confidence": packed[:, 0:1],
            "alpha": packed[:, 1:2],
            "beta": packed[:, 2:3],
            "uncertainty": packed[:, 3:4],
        }
    else:
        conf = _mlp_call(confidence_sigmoid_kernel, x, w1, b1, w2, b2,
                         out_cols=1, batch_tile=batch_tile)
        return {"confidence": conf}


# ---------------------------------------------------------------------------
# Init + pure-JAX reference
# ---------------------------------------------------------------------------

def init_params(key, input_dim, hidden_dim=64, use_beta=True, dtype=jnp.float32):
    """Deterministic init mirroring nn.Linear shapes (weights stored as (in, out))."""
    out_dim = 2 if use_beta else 1
    k1, k2, k3, k4 = jax.random.split(key, 4)
    lim1 = 1.0 / (input_dim ** 0.5)
    lim2 = 1.0 / (hidden_dim ** 0.5)
    w1 = jax.random.uniform(k1, (input_dim, hidden_dim), dtype, -lim1, lim1)
    b1 = jax.random.uniform(k2, (hidden_dim,), dtype, -lim1, lim1)
    w2 = jax.random.uniform(k3, (hidden_dim, out_dim), dtype, -lim2, lim2)
    b2 = jax.random.uniform(k4, (out_dim,), dtype, -lim2, lim2)
    return w1, b1, w2, b2


def ref_forward(x, params, use_beta=True):
    """Pure-JAX f32 reference mirroring the PyTorch module."""
    w1, b1, w2, b2 = params
    h = jnp.maximum(jnp.dot(x, w1) + b1, 0.0)
    z = jnp.dot(h, w2) + b2
    if use_beta:
        p = jnp.maximum(z, 0.0) + jnp.log(1.0 + jnp.exp(-jnp.abs(z)))   # softplus
        alpha = p[:, 0:1] + 1.0
        beta = p[:, 1:2] + 1.0
        s = alpha + beta
        return {
            "confidence": alpha / s,
            "alpha": alpha,
            "beta": beta,
            "uncertainty": jnp.sqrt(alpha * beta / (s * s * (s + 1.0))),
        }
    else:
        return {"confidence": 1.0 / (1.0 + jnp.exp(-z))}


# ---------------------------------------------------------------------------
# Self-test
# ---------------------------------------------------------------------------

if __name__ == "__main__":
    input_dim = 32
    hidden_dim = 64

    key = jax.random.PRNGKey(0)
    kx, kp, kx2, kp2 = jax.random.split(key, 4)

    def check(out, ref, tol=1e-3):
        for k in ref:
            assert out[k].shape == ref[k].shape, (k, out[k].shape, ref[k].shape)
            assert jnp.allclose(out[k], ref[k], atol=tol, rtol=tol), k

    # 1) Beta branch (module default), adaptive tile (B=16 -> 2 tiles of 8).
    x = jax.random.normal(kx, (16, input_dim), jnp.float32)
    params = init_params(kp, input_dim, hidden_dim, use_beta=True)
    out = confidence_head_forward(x, params, use_beta=True)
    out = jax.tree_util.tree_map(jax.block_until_ready, out)
    check(out, ref_forward(x, params, use_beta=True))

    # 2) Beta branch, ragged batch (B=20, TB=8 -> 3 tiles, last one ragged).
    x2 = jax.random.normal(kx2, (20, input_dim), jnp.float32)
    out2 = confidence_head_forward(x2, params, use_beta=True, batch_tile=8)
    out2 = jax.tree_util.tree_map(jax.block_until_ready, out2)
    check(out2, ref_forward(x2, params, use_beta=True))

    # 3) Sigmoid branch (use_beta=False).
    params_s = init_params(kp2, input_dim, hidden_dim, use_beta=False)
    out3 = confidence_head_forward(x, params_s, use_beta=False)
    out3 = jax.tree_util.tree_map(jax.block_until_ready, out3)
    check(out3, ref_forward(x, params_s, use_beta=False))

    print("KERNEL_OK")
</pallas_src>

<mosaic_0001>
module attributes {stable_mosaic.version = 11 : i64} {
  func.func @confidence_beta_kernel(%arg0: i32, %arg1: memref<8x32xf32, #tpu.memory_space<vmem>>, %arg2: memref<32x128xf32, #tpu.memory_space<vmem>>, %arg3: memref<1x128xf32, #tpu.memory_space<vmem>>, %arg4: memref<128x2xf32, #tpu.memory_space<vmem>>, %arg5: memref<1x2xf32, #tpu.memory_space<vmem>>, %arg6: memref<8x4xf32, #tpu.memory_space<vmem>>) attributes {dimension_semantics = [#tpu.dimension_semantics<parallel>], iteration_bounds = array<i64: 2>, scalar_prefetch = 0 : i64, scratch_operands = 0 : i64, tpu.core_type = #tpu.core_type<tc>, window_params = [{transform_indices = @transform_0, window_bounds = array<i64: 8, 32>}, {pipeline_mode = #tpu.pipeline_mode<synchronous>, transform_indices = @transform_1, window_bounds = array<i64: 32, 128>}, {pipeline_mode = #tpu.pipeline_mode<synchronous>, transform_indices = @transform_2, window_bounds = array<i64: 1, 128>}, {pipeline_mode = #tpu.pipeline_mode<synchronous>, transform_indices = @transform_3, window_bounds = array<i64: 128, 2>}, {pipeline_mode = #tpu.pipeline_mode<synchronous>, transform_indices = @transform_4, window_bounds = array<i64: 1, 2>}, {transform_indices = @transform_5, window_bounds = array<i64: 8, 4>}]} {
    %c0 = arith.constant 0 : index
    %c0_0 = arith.constant 0 : index
    %0 = vector.load %arg1[%c0, %c0_0] : memref<8x32xf32, #tpu.memory_space<vmem>>, vector<8x32xf32>
    %c0_1 = arith.constant 0 : index
    %c0_2 = arith.constant 0 : index
    %1 = vector.load %arg2[%c0_1, %c0_2] : memref<32x128xf32, #tpu.memory_space<vmem>>, vector<32x128xf32>
    %cst = arith.constant dense<0.000000e+00> : vector<8x128xf32>
    %2 = tpu.matmul %0, %1, %cst {dimension_numbers = #tpu.dot_dimension_numbers<[1], [0], [0], [1], [0, 0, 1, 1], [], []>} : vector<8x32xf32>, vector<32x128xf32>, vector<8x128xf32> -> vector<8x128xf32>
    %c0_3 = arith.constant 0 : index
    %c0_4 = arith.constant 0 : index
    %3 = vector.load %arg3[%c0_3, %c0_4] : memref<1x128xf32, #tpu.memory_space<vmem>>, vector<1x128xf32>
    %4 = vector.broadcast %3 : vector<1x128xf32> to vector<8x128xf32>
    %5 = arith.addf %2, %4 : vector<8x128xf32>
    %cst_5 = arith.constant 0.000000e+00 : f32
    %6 = vector.broadcast %cst_5 : f32 to vector<8x128xf32>
    %7 = arith.maximumf %5, %6 : vector<8x128xf32>
    %c0_6 = arith.constant 0 : index
    %c0_7 = arith.constant 0 : index
    %8 = vector.load %arg4[%c0_6, %c0_7] : memref<128x2xf32, #tpu.memory_space<vmem>>, vector<128x2xf32>
    %cst_8 = arith.constant dense<0.000000e+00> : vector<8x2xf32>
    %9 = tpu.matmul %7, %8, %cst_8 {dimension_numbers = #tpu.dot_dimension_numbers<[1], [0], [0], [1], [0, 0, 1, 1], [], []>} : vector<8x128xf32>, vector<128x2xf32>, vector<8x2xf32> -> vector<8x2xf32>
    %c0_9 = arith.constant 0 : index
    %c0_10 = arith.constant 0 : index
    %10 = vector.load %arg5[%c0_9, %c0_10] : memref<1x2xf32, #tpu.memory_space<vmem>>, vector<1x2xf32>
    %11 = vector.broadcast %10 : vector<1x2xf32> to vector<8x2xf32>
    %12 = arith.addf %9, %11 : vector<8x2xf32>
    %cst_11 = arith.constant 0.000000e+00 : f32
    %13 = vector.broadcast %cst_11 : f32 to vector<8x2xf32>
    %14 = arith.maximumf %12, %13 : vector<8x2xf32>
    %15 = math.absf %12 : vector<8x2xf32>
    %cst_12 = arith.constant 0.000000e+00 : f32
    %16 = vector.broadcast %cst_12 : f32 to vector<8x2xf32>
    %17 = arith.subf %16, %15 : vector<8x2xf32>
    %18 = math.exp %17 : vector<8x2xf32>
    %cst_13 = arith.constant 1.000000e+00 : f32
    %19 = vector.broadcast %cst_13 : f32 to vector<8x2xf32>
    %20 = arith.addf %19, %18 : vector<8x2xf32>
    %21 = math.log %20 : vector<8x2xf32>
    %22 = arith.addf %14, %21 : vector<8x2xf32>
    %23 = vector.extract_strided_slice %22 {offsets = [0, 0], sizes = [8, 1], strides = [1, 1]} : vector<8x2xf32> to vector<8x1xf32>
    %cst_14 = arith.constant 1.000000e+00 : f32
    %24 = vector.broadcast %cst_14 : f32 to vector<8x1xf32>
    %25 = arith.addf %23, %24 : vector<8x1xf32>
    %26 = vector.extract_strided_slice %22 {offsets = [0, 1], sizes = [8, 1], strides = [1, 1]} : vector<8x2xf32> to vector<8x1xf32>
    %cst_15 = arith.constant 1.000000e+00 : f32
    %27 = vector.broadcast %cst_15 : f32 to vector<8x1xf32>
    %28 = arith.addf %26, %27 : vector<8x1xf32>
    %29 = arith.addf %25, %28 : vector<8x1xf32>
    %cst_16 = arith.constant 1.000000e+00 : f32
    %30 = vector.broadcast %cst_16 : f32 to vector<8x1xf32>
    %31 = arith.divf %30, %29 : vector<8x1xf32>
    %32 = arith.mulf %25, %31 : vector<8x1xf32>
    %33 = arith.mulf %25, %28 : vector<8x1xf32>
    %34 = arith.mulf %33, %31 : vector<8x1xf32>
    %35 = arith.mulf %34, %31 : vector<8x1xf32>
    %cst_17 = arith.constant 1.000000e+00 : f32
    %36 = vector.broadcast %cst_17 : f32 to vector<8x1xf32>
    %37 = arith.addf %29, %36 : vector<8x1xf32>
    %38 = arith.divf %35, %37 : vector<8x1xf32>
    %39 = math.sqrt %38 : vector<8x1xf32>
    %40 = tpu.iota {dimensions = array<i32: 1>} : vector<8x4xi32>
    %c0_i32 = arith.constant 0 : i32
    %41 = vector.broadcast %c0_i32 : i32 to vector<8x4xi32>
    %42 = arith.cmpi eq, %40, %41 : vector<8x4xi32>
    %c1_i32 = arith.constant 1 : i32
    %43 = vector.broadcast %c1_i32 : i32 to vector<8x4xi32>
    %44 = arith.cmpi eq, %40, %43 : vector<8x4xi32>
    %c2_i32 = arith.constant 2 : i32
    %45 = vector.broadcast %c2_i32 : i32 to vector<8x4xi32>
    %46 = arith.cmpi eq, %40, %45 : vector<8x4xi32>
    %47 = vector.shape_cast %28 : vector<8x1xf32> to vector<8x1xf32>
    %48 = vector.broadcast %47 : vector<8x1xf32> to vector<8x4xf32>
    %49 = vector.shape_cast %39 : vector<8x1xf32> to vector<8x1xf32>
    %50 = vector.broadcast %49 : vector<8x1xf32> to vector<8x4xf32>
    %51 = arith.select %46, %48, %50 : vector<8x4xi1>, vector<8x4xf32>
    %52 = vector.shape_cast %25 : vector<8x1xf32> to vector<8x1xf32>
    %53 = vector.broadcast %52 : vector<8x1xf32> to vector<8x4xf32>
    %54 = arith.select %44, %53, %51 : vector<8x4xi1>, vector<8x4xf32>
    %55 = vector.shape_cast %32 : vector<8x1xf32> to vector<8x1xf32>
    %56 = vector.broadcast %55 : vector<8x1xf32> to vector<8x4xf32>
    %57 = arith.select %42, %56, %54 : vector<8x4xi1>, vector<8x4xf32>
    %c0_18 = arith.constant 0 : index
    %c0_19 = arith.constant 0 : index
    %58 = vector.load %arg6[%c0_18, %c0_19] : memref<8x4xf32, #tpu.memory_space<vmem>>, vector<8x4xf32>
    tpu.vector_store %arg6[%c0_18, %c0_19], %57 {strides = array<i32>} : memref<8x4xf32, #tpu.memory_space<vmem>>, vector<8x4xf32>,
    return
  }
  func.func @transform_0(%arg0: i32) -> (i32, i32) {
    %c0_i32 = arith.constant 0 : i32
    %c0_i32_0 = arith.constant 0 : i32
    return %arg0, %c0_i32 : i32, i32
  }
  func.func @transform_1(%arg0: i32) -> (i32, i32) {
    %c0_i32 = arith.constant 0 : i32
    %c0_i32_0 = arith.constant 0 : i32
    %c0_i32_1 = arith.constant 0 : i32
    return %c0_i32, %c0_i32_0 : i32, i32
  }
  func.func @transform_2(%arg0: i32) -> (i32, i32) {
    %c0_i32 = arith.constant 0 : i32
    %c0_i32_0 = arith.constant 0 : i32
    %c0_i32_1 = arith.constant 0 : i32
    return %c0_i32, %c0_i32_0 : i32, i32
  }
  func.func @transform_3(%arg0: i32) -> (i32, i32) {
    %c0_i32 = arith.constant 0 : i32
    %c0_i32_0 = arith.constant 0 : i32
    %c0_i32_1 = arith.constant 0 : i32
    return %c0_i32, %c0_i32_0 : i32, i32
  }
  func.func @transform_4(%arg0: i32) -> (i32, i32) {
    %c0_i32 = arith.constant 0 : i32
    %c0_i32_0 = arith.constant 0 : i32
    %c0_i32_1 = arith.constant 0 : i32
    return %c0_i32, %c0_i32_0 : i32, i32
  }
  func.func @transform_5(%arg0: i32) -> (i32, i32) {
    %c0_i32 = arith.constant 0 : i32
    %c0_i32_0 = arith.constant 0 : i32
    return %arg0, %c0_i32 : i32, i32
  }
}

</mosaic_0001>

<llo_original>
// kernel: tpu_custom_call.1
$region0: #{tpu_custom_call.1}
  #allocation0 [shape = 'u32[]', space=smem, size = 0x4, offset = 0x4, fixed_abs, tag = 'smem constant byte address 0x4 - core index']
  #allocation1 [shape = 'u32[144,128]{1,0:T(1,128)}', space=vmem, size = 0x12000, scoped, tag = 'internal scratch']
  %s0 = inlined_call_operand.vmem [shape: f32[16,32], index: 0, kind: input, shape index: {}]
  %s1 = inlined_call_operand.vmem [shape: f32[32,128], index: 1, kind: input, shape index: {}]
  %s2 = inlined_call_operand.vmem [shape: f32[1,128], index: 2, kind: input, shape index: {}]
  %s3 = inlined_call_operand.vmem [shape: f32[128,2], index: 3, kind: input, shape index: {}]
  %s4 = inlined_call_operand.vmem [shape: f32[1,2], index: 4, kind: input, shape index: {}]
  %s5 = inlined_call_operand.vmem [shape: f32[16,4], index: 5, kind: output, shape index: {}]
  %s6 = sld [smem:[#allocation0]]
  $region53: #{tpu_custom_call.1} parent=0
    _
  %s8 = ssub.s32 1, %s6
  %s9 = scalar_select 0, %s8, %s6
  loop: start=0, step=1, limit=4
  $region2: #{tpu_custom_call.1} parent=0 // loop_pre_header
    _
  $region3: #{tpu_custom_call.1} parent=0 // loop_header
    %s11 = sphi 0, %s15
    %p12 = scmp.ge.s32.totalorder %s11, 4
    %s21 = sphi 0, %s23
    %s24 = sphi 0, %s21
    %s25 = sphi 0, %s24
    %s41 = sphi 0, %s25
    %s45 = sphi 0, %s45
    %s47 = sphi 0, %s45
    %s48 = sphi 0, %s47
    %s62 = sphi 0, %s48
    %s66 = sphi 0, %s66
    %s68 = sphi 0, %s66
    %s69 = sphi 0, %s68
    %s83 = sphi 0, %s69
    %s87 = sphi 0, %s87
    %s89 = sphi 0, %s87
    %s90 = sphi 0, %s89
    %s104 = sphi 0, %s90
    %s108 = sphi 0, %s108
    %s110 = sphi 0, %s108
    %s111 = sphi 0, %s110
    %s125 = sphi 0, %s111
    %s131 = sphi 0, %s133
    %s134 = sphi 0, %s131
    %s135 = sphi 0, %s134
    %s151 = sphi 0, %s135
  $region4: #{tpu_custom_call.1} parent=0 // loop_header_branch
    %14 = sbr.rel (%p12) target = $region8
  $region5: #{tpu_custom_call.1} parent=0 // loop_body
    %s16 = ssub.s32 %s11, 1
    %s17 = ssub.s32 %s11, 2
    %s18 = sadd.s32 %s11, 1
    %s19 = ssub.s32 %s11, %s18
    %p20 = scmp.eq.s32.totalorder %s19, 0
    %s22 = sadd.s32 %s21, 1
    %s23 = scalar_select %p20, %s21, %s22
    %p26 = pneg %p20
    %p27 = scmp.eq.s32.totalorder %s11, 1
    %p28 = por %p26, %p27
    %p29 = scmp.ne.s32.totalorder %s21, %s24
    %p30 = scmp.eq.s32.totalorder %s11, 0
    %p31 = por %p29, %p30
    %p32 = scmp.ne.s32.totalorder %s21, %s24
    %p33 = scmp.eq.s32.totalorder %s16, 1
    %p34 = por %p32, %p33
    %p35 = scmp.ne.s32.totalorder %s24, %s25
    %p36 = scmp.eq.s32.totalorder %s16, 0
    %p37 = por %p35, %p36
    %p38 = scmp.ne.s32.totalorder %s24, %s25
    %p39 = scmp.eq.s32.totalorder %s17, 1
    %p40 = por %p38, %p39
    %p42 = scmp.ne.s32.totalorder %s25, %s41
    %p43 = scmp.eq.s32.totalorder %s17, 0
    %p44 = por %p42, %p43
    %s46 = sadd.s32 %s45, 1
    %p49 = scmp.eq.s32.totalorder %s11, 1
    %p50 = scmp.ne.s32.totalorder %s45, %s47
    %p51 = scmp.eq.s32.totalorder %s11, 0
    %p52 = por %p50, %p51
    %p53 = scmp.ne.s32.totalorder %s45, %s47
    %p54 = scmp.eq.s32.totalorder %s16, 1
    %p55 = por %p53, %p54
    %p56 = scmp.ne.s32.totalorder %s47, %s48
    %p57 = scmp.eq.s32.totalorder %s16, 0
    %p58 = por %p56, %p57
    %p59 = scmp.ne.s32.totalorder %s47, %s48
    %p60 = scmp.eq.s32.totalorder %s17, 1
    %p61 = por %p59, %p60
    %p63 = scmp.ne.s32.totalorder %s48, %s62
    %p64 = scmp.eq.s32.totalorder %s17, 0
    %p65 = por %p63, %p64
    %s67 = sadd.s32 %s66, 1
    %p70 = scmp.eq.s32.totalorder %s11, 1
    %p71 = scmp.ne.s32.totalorder %s66, %s68
    %p72 = scmp.eq.s32.totalorder %s11, 0
    %p73 = por %p71, %p72
    %p74 = scmp.ne.s32.totalorder %s66, %s68
    %p75 = scmp.eq.s32.totalorder %s16, 1
    %p76 = por %p74, %p75
    %p77 = scmp.ne.s32.totalorder %s68, %s69
    %p78 = scmp.eq.s32.totalorder %s16, 0
    %p79 = por %p77, %p78
    %p80 = scmp.ne.s32.totalorder %s68, %s69
    %p81 = scmp.eq.s32.totalorder %s17, 1
    %p82 = por %p80, %p81
    %p84 = scmp.ne.s32.totalorder %s69, %s83
    %p85 = scmp.eq.s32.totalorder %s17, 0
    %p86 = por %p84, %p85
    %s88 = sadd.s32 %s87, 1
    %p91 = scmp.eq.s32.totalorder %s11, 1
    %p92 = scmp.ne.s32.totalorder %s87, %s89
    %p93 = scmp.eq.s32.totalorder %s11, 0
    %p94 = por %p92, %p93
    %p95 = scmp.ne.s32.totalorder %s87, %s89
    %p96 = scmp.eq.s32.totalorder %s16, 1
    %p97 = por %p95, %p96
    %p98 = scmp.ne.s32.totalorder %s89, %s90
    %p99 = scmp.eq.s32.totalorder %s16, 0
    %p100 = por %p98, %p99
    %p101 = scmp.ne.s32.totalorder %s89, %s90
    %p102 = scmp.eq.s32.totalorder %s17, 1
    %p103 = por %p101, %p102
    %p105 = scmp.ne.s32.totalorder %s90, %s104
    %p106 = scmp.eq.s32.totalorder %s17, 0
    %p107 = por %p105, %p106
    %s109 = sadd.s32 %s108, 1
    %p112 = scmp.eq.s32.totalorder %s11, 1
    %p113 = scmp.ne.s32.totalorder %s108, %s110
    %p114 = scmp.eq.s32.totalorder %s11, 0
    %p115 = por %p113, %p114
    %p116 = scmp.ne.s32.totalorder %s108, %s110
    %p117 = scmp.eq.s32.totalorder %s16, 1
    %p118 = por %p116, %p117
    %p119 = scmp.ne.s32.totalorder %s110, %s111
    %p120 = scmp.eq.s32.totalorder %s16, 0
    %p121 = por %p119, %p120
    %p122 = scmp.ne.s32.totalorder %s110, %s111
    %p123 = scmp.eq.s32.totalorder %s17, 1
    %p124 = por %p122, %p123
    %p126 = scmp.ne.s32.totalorder %s111, %s125
    %p127 = scmp.eq.s32.totalorder %s17, 0
    %p128 = por %p126, %p127
    %s129 = ssub.s32 %s11, %s18
    %p130 = scmp.eq.s32.totalorder %s129, 0
    %s132 = sadd.s32 %s131, 1
    %s133 = scalar_select %p130, %s131, %s132
    %p136 = pneg %p130
    %p137 = scmp.eq.s32.totalorder %s11, 1
    %p138 = por %p136, %p137
    %p139 = scmp.ne.s32.totalorder %s131, %s134
    %p140 = scmp.eq.s32.totalorder %s11, 0
    %p141 = por %p139, %p140
    %p142 = scmp.ne.s32.totalorder %s131, %s134
    %p143 = scmp.eq.s32.totalorder %s16, 1
    %p144 = por %p142, %p143
    %p145 = scmp.ne.s32.totalorder %s134, %s135
    %p146 = scmp.eq.s32.totalorder %s16, 0
    %p147 = por %p145, %p146
    %p148 = scmp.ne.s32.totalorder %s134, %s135
    %p149 = scmp.eq.s32.totalorder %s17, 1
    %p150 = por %p148, %p149
    %p152 = scmp.ne.s32.totalorder %s135, %s151
    %p153 = scmp.eq.s32.totalorder %s17, 0
    %p154 = por %p152, %p153
    %p155 = scmp.le.s32.totalorder 1, %s11
    %p156 = scmp.lt.s32.totalorder %s11, 3
    %p157 = pnand %p155, %p156
    %p158 = pneg %p157
    // Predicated region
    $region9: #{tpu_custom_call.1} parent=5 // pred_check
      _
    $region10: #{tpu_custom_call.1} parent=5 // pred_check_branch
      %160 = sbr.rel (%p157) target = $region12
    $region11: #{tpu_custom_call.1} parent=5 // pred_region
      %s161 = ssub.s32 %s11, 1
      // Predicated region
      $region13: #{tpu_custom_call.1} parent=11 // pred_check
        %p162 = pneg %p58
      $region14: #{tpu_custom_call.1} parent=11 // pred_check_branch
        %164 = sbr.rel (%p162) target = $region16
      $region15: #{tpu_custom_call.1} parent=11 // pred_region
        _
      $region16: #{tpu_custom_call.1} parent=11 // pred_fallthru
        _
      // Predicated region
      $region17: #{tpu_custom_call.1} parent=11 // pred_check
        %p165 = pneg %p79
      $region18: #{tpu_custom_call.1} parent=11 // pred_check_branch
        %167 = sbr.rel (%p165) target = $region20
      $region19: #{tpu_custom_call.1} parent=11 // pred_region
        _
      $region20: #{tpu_custom_call.1} parent=11 // pred_fallthru
        _
      // Predicated region
      $region21: #{tpu_custom_call.1} parent=11 // pred_check
        %p168 = pneg %p100
      $region22: #{tpu_custom_call.1} parent=11 // pred_check_branch
        %170 = sbr.rel (%p168) target = $region24
      $region23: #{tpu_custom_call.1} parent=11 // pred_region
        _
      $region24: #{tpu_custom_call.1} parent=11 // pred_fallthru
        _
      // Predicated region
      $region25: #{tpu_custom_call.1} parent=11 // pred_check
        %p171 = pneg %p121
      $region26: #{tpu_custom_call.1} parent=11 // pred_check_branch
        %173 = sbr.rel (%p171) target = $region28
      $region27: #{tpu_custom_call.1} parent=11 // pred_region
        _
      $region28: #{tpu_custom_call.1} parent=11 // pred_fallthru
        _
    $region12: #{tpu_custom_call.1} parent=5 // pred_fallthru
      _
    %p174 = scmp.lt.s32.totalorder %s11, 2
    // Predicated region
    $region29: #{tpu_custom_call.1} parent=5 // pred_check
      %p175 = pneg %p174
    $region30: #{tpu_custom_call.1} parent=5 // pred_check_branch
      %177 = sbr.rel (%p175) target = $region32
    $region31: #{tpu_custom_call.1} parent=5 // pred_region
      // Predicated region
      $region33: #{tpu_custom_call.1} parent=31 // pred_check
        %p178 = pneg %p31
      $region34: #{tpu_custom_call.1} parent=31 // pred_check_branch
        %180 = sbr.rel (%p178) target = $region36
      $region35: #{tpu_custom_call.1} parent=31 // pred_region
        %p181 = scmp.lt.s32.totalorder %s11, 1
        %s182 = scalar_select %p181, %s11, 1
        %s183 = smul.addr %s182, 8
        %s184 = scalar_lea.vmem %s0, %s183
      $region36: #{tpu_custom_call.1} parent=31 // pred_fallthru
        _
    $region32: #{tpu_custom_call.1} parent=5 // pred_fallthru
      _
    %p185 = scmp.le.s32.totalorder 1, %s11
    %p186 = scmp.lt.s32.totalorder %s11, 3
    %p187 = pnand %p185, %p186
    %p188 = pneg %p187
    // Predicated region
    $region37: #{tpu_custom_call.1} parent=5 // pred_check
      _
    $region38: #{tpu_custom_call.1} parent=5 // pred_check_branch
      %190 = sbr.rel (%p187) target = $region40
    $region39: #{tpu_custom_call.1} parent=5 // pred_region
      %s191 = ssub.s32 %s11, 1
      %p192 = scmp.lt.s32.totalorder %s16, 1
      %s193 = scalar_select %p192, %s16, 1
      %s194 = smul.addr %s193, 8
      %s195 = scalar_lea.vmem %s0, %s194
      %p196 = pneg %p37
      %p197 = pneg %p34
      %p198 = pneg %p58
      %p199 = pneg %p55
      %p200 = pneg %p79
      %p201 = pneg %p76
      %p202 = pneg %p100
      %p203 = pneg %p97
      %p204 = pneg %p121
      %p205 = pneg %p118
      %p206 = pneg %p147
      %p207 = pneg %p144
      %p208 = scmp.lt.s32.totalorder %s16, 1
      %s209 = scalar_select %p208, %s16, 1
      %s210 = smul.addr %s209, 8
      %s211 = scalar_lea.vmem %s5, %s210
      %p212 = scmp.lt.s32.totalorder %s16, 1
      %s213 = scalar_select %p212, %s16, 1
      %s214 = smul.addr %s213, 8
      %s215 = scalar_lea.vmem %s0, %s214
      %p216 = scmp.lt.s32.totalorder %s16, 1
      %s217 = scalar_select %p216, %s16, 1
      %s218 = smul.addr %s217, 8
      %s219 = scalar_lea.vmem %s5, %s218
      %v220 = vld [vmem:[%s215] sm:$0xff]
      %v221 = vld [vmem:[%s1] sm:$0xff]
      %v222 = vld [vmem:[%s1 + $0x8] sm:$0xff]
      %v223 = vld [vmem:[%s1 + $0x10] sm:$0xff]
      %v224 = vld [vmem:[%s1 + $0x18] sm:$0xff]
      %v225 = vld [vmem:[%s2] sm:$0x1]
      %v227 = vlaneseq
      %v228 = vshrl.u32 %v227, 7
      %v229 = vsub.s32 0, %v228
      %v230 = vrot.slane %v225, %v229
      %vm232 = vcmask 261120
      %v234 = vsel %vm232, %v220, 0
      %236 = vmatprep.subr.mxu0 0.0
      %237 = vmatpush1.msra.mxu0 0.0
      %238 = vmatprep.subr.mxu0 0.0
      %239 = vmatpush1.msra.mxu0 0.0
      %240 = vmatprep.subr.mxu0 0.0
      %241 = vmatpush1.msra.mxu0 0.0
      %242 = vmatprep.subr.mxu0 0.0
      %243 = vmatpush1.msra.mxu0 0.0
      %244 = vmatprep.subr.mxu0 0.0
      %245 = vmatpush1.msra.mxu0 0.0
      %246 = vmatprep.subr.mxu0 0.0
      %247 = vmatpush1.msra.mxu0 0.0
      %248 = vmatprep.subr.mxu0 0.0
      %249 = vmatpush1.msra.mxu0 0.0
      %250 = vmatprep.subr.mxu0 0.0
      %251 = vmatpush1.msra.mxu0 0.0
      %252 = vmatprep.subr.mxu0 0.0
      %253 = vmatpush1.msra.mxu0 0.0
      %254 = vmatprep.subr.mxu0 0.0
      %255 = vmatpush1.msra.mxu0 0.0
      %256 = vmatprep.subr.mxu0 0.0
      %257 = vmatpush1.msra.mxu0 0.0
      %258 = vmatprep.subr.mxu0 0.0
      %259 = vmatpush1.msra.mxu0 0.0
      %260 = vmatprep.subr.mxu0 0.0
      %261 = vmatpush1.msra.mxu0 %v224
      %262 = vmatprep.subr.mxu0 0.0
      %263 = vmatpush1.msra.mxu0 %v223
      %264 = vmatprep.subr.mxu0 0.0
      %265 = vmatpush1.msra.mxu0 %v222
      %266 = vmatprep.subr.mxu0 0.0
      %267 = vmatpush1.msra.mxu0 %v221
      %268 = vmatprep.subr.mxu0 0.0
      %269 = vmatpush2.msra.mxu0 0.0
      %270 = vmatprep.subr.mxu0 0.0
      %271 = vmatpush2.msra.mxu0 0.0
      %272 = vmatprep.subr.mxu0 0.0
      %273 = vmatpush2.msra.mxu0 0.0
      %274 = vmatprep.subr.mxu0 0.0
      %275 = vmatpush2.msra.mxu0 0.0
      %276 = vmatprep.subr.mxu0 0.0
      %277 = vmatpush2.msra.mxu0 0.0
      %278 = vmatprep.subr.mxu0 0.0
      %279 = vmatpush2.msra.mxu0 0.0
      %280 = vmatprep.subr.mxu0 0.0
      %281 = vmatpush2.msra.mxu0 0.0
      %282 = vmatprep.subr.mxu0 0.0
      %283 = vmatpush2.msra.mxu0 0.0
      %284 = vmatprep.subr.mxu0 0.0
      %285 = vmatpush2.msra.mxu0 0.0
      %286 = vmatprep.subr.mxu0 0.0
      %287 = vmatpush2.msra.mxu0 0.0
      %288 = vmatprep.subr.mxu0 0.0
      %289 = vmatpush2.msra.mxu0 0.0
      %290 = vmatprep.subr.mxu0 0.0
      %291 = vmatpush2.msra.mxu0 0.0
      %292 = vmatprep.subr.mxu0 0.0
      %293 = vmatpush2.msra.mxu0 0.0
      %294 = vmatprep.subr.mxu0 0.0
      %295 = vmatpush2.msra.mxu0 0.0
      %296 = vmatprep.subr.mxu0 0.0
      %297 = vmatpush2.msra.mxu0 0.0
      %298 = vmatprep.subr.mxu0 0.0
      %299 = vmatpush2.msra.mxu0 0.0
      %300 = vmatprep.mubr.f32.mxu0 0.0
      %301 = vmatmul.mubr.f32.gmra.mxu0 %v234
      %v302 = vpop.f32.mrf.mxu0
      %v303 = vadd.f32 %v230, %v302
      %v304 = vpop.f32.mrf.mxu0
      %305 = vdwg.mxu0
      %v306 = vmax.f32 %v303, 0.0
      %v307 = vld [vmem:[%s3] sm:$0xff]
      %v308 = vld [vmem:[%s3 + $0x8] sm:$0xff]
      %v309 = vld [vmem:[%s3 + $0x10] sm:$0xff]
      %v310 = vld [vmem:[%s3 + $0x18] sm:$0xff]
      %v311 = vld [vmem:[%s3 + $0x20] sm:$0xff]
      %v312 = vld [vmem:[%s3 + $0x28] sm:$0xff]
      %v313 = vld [vmem:[%s3 + $0x30] sm:$0xff]
      %v314 = vld [vmem:[%s3 + $0x38] sm:$0xff]
      %v315 = vld [vmem:[%s3 + $0x40] sm:$0xff]
      %v316 = vld [vmem:[%s3 + $0x48] sm:$0xff]
      %v317 = vld [vmem:[%s3 + $0x50] sm:$0xff]
      %v318 = vld [vmem:[%s3 + $0x58] sm:$0xff]
      %v319 = vld [vmem:[%s3 + $0x60] sm:$0xff]
      %v320 = vld [vmem:[%s3 + $0x68] sm:$0xff]
      %v321 = vld [vmem:[%s3 + $0x70] sm:$0xff]
      %v322 = vld [vmem:[%s3 + $0x78] sm:$0xff]
      %v323 = vld [vmem:[%s4] sm:$0x1]
      %v325 = vlaneseq
      %v326 = vshrl.u32 %v325, 7
      %v327 = vsub.s32 0, %v326
      %v328 = vrot.slane %v323, %v327
      %330 = vmatprep.subr.mxu0 0.0
      %331 = vmatpush1.msra.mxu0 %v322
      %332 = vmatprep.subr.mxu0 0.0
      %333 = vmatpush1.msra.mxu0 %v321
      %334 = vmatprep.subr.mxu0 0.0
      %335 = vmatpush1.msra.mxu0 %v320
      %336 = vmatprep.subr.mxu0 0.0
      %337 = vmatpush1.msra.mxu0 %v319
      %338 = vmatprep.subr.mxu0 0.0
      %339 = vmatpush1.msra.mxu0 %v318
      %340 = vmatprep.subr.mxu0 0.0
      %341 = vmatpush1.msra.mxu0 %v317
      %342 = vmatprep.subr.mxu0 0.0
      %343 = vmatpush1.msra.mxu0 %v316
      %344 = vmatprep.subr.mxu0 0.0
      %345 = vmatpush1.msra.mxu0 %v315
      %346 = vmatprep.subr.mxu0 0.0
      %347 = vmatpush1.msra.mxu0 %v314
      %348 = vmatprep.subr.mxu0 0.0
      %349 = vmatpush1.msra.mxu0 %v313
      %350 = vmatprep.subr.mxu0 0.0
      %351 = vmatpush1.msra.mxu0 %v312
      %352 = vmatprep.subr.mxu0 0.0
      %353 = vmatpush1.msra.mxu0 %v311
      %354 = vmatprep.subr.mxu0 0.0
      %355 = vmatpush1.msra.mxu0 %v310
      %356 = vmatprep.subr.mxu0 0.0
      %357 = vmatpush1.msra.mxu0 %v309
      %358 = vmatprep.subr.mxu0 0.0
      %359 = vmatpush1.msra.mxu0 %v308
      %360 = vmatprep.subr.mxu0 0.0
      %361 = vmatpush1.msra.mxu0 %v307
      %362 = vmatprep.subr.mxu0 0.0
      %363 = vmatpush2.msra.mxu0 0.0
      %364 = vmatprep.subr.mxu0 0.0
      %365 = vmatpush2.msra.mxu0 0.0
      %366 = vmatprep.subr.mxu0 0.0
      %367 = vmatpush2.msra.mxu0 0.0
      %368 = vmatprep.subr.mxu0 0.0
      %369 = vmatpush2.msra.mxu0 0.0
      %370 = vmatprep.subr.mxu0 0.0
      %371 = vmatpush2.msra.mxu0 0.0
      %372 = vmatprep.subr.mxu0 0.0
      %373 = vmatpush2.msra.mxu0 0.0
      %374 = vmatprep.subr.mxu0 0.0
      %375 = vmatpush2.msra.mxu0 0.0
      %376 = vmatprep.subr.mxu0 0.0
      %377 = vmatpush2.msra.mxu0 0.0
      %378 = vmatprep.subr.mxu0 0.0
      %379 = vmatpush2.msra.mxu0 0.0
      %380 = vmatprep.subr.mxu0 0.0
      %381 = vmatpush2.msra.mxu0 0.0
      %382 = vmatprep.subr.mxu0 0.0
      %383 = vmatpush2.msra.mxu0 0.0
      %384 = vmatprep.subr.mxu0 0.0
      %385 = vmatpush2.msra.mxu0 0.0
      %386 = vmatprep.subr.mxu0 0.0
      %387 = vmatpush2.msra.mxu0 0.0
      %388 = vmatprep.subr.mxu0 0.0
      %389 = vmatpush2.msra.mxu0 0.0
      %390 = vmatprep.subr.mxu0 0.0
      %391 = vmatpush2.msra.mxu0 0.0
      %392 = vmatprep.subr.mxu0 0.0
      %393 = vmatpush2.msra.mxu0 0.0
      %394 = vmatprep.mubr.f32.mxu0 0.0
      %395 = vmatmul.mubr.f32.gmra.mxu0 %v306
      %v396 = vpop.f32.mrf.mxu0
      %v397 = vadd.f32 %v328, %v396
      %v398 = vpop.f32.mrf.mxu0
      %399 = vdwg.mxu0
      %v400 = vmax.f32 %v397, 0.0
      %v401 = vand.u32 2147483647, %v397
      %v402 = vsub.f32 0.0, %v401
      %v403 = vmul.f32 %v402, 1.442695
      %v404 = vpow.pop %v403
      %v405 = vadd.f32 %v404, 1.0
      %v406 = vlog2.pop %v405
      %v407 = vmul.f32 %v406, 0.6931472
      %v408 = vadd.f32 %v400, %v407
      %v409 = vadd.f32 %v408, 1.0
      %411 = vrot.lane.b32.xlu0 %v409, 127
      %v412 = vpop.permute.xlu0 %411
      %v414 = vadd.f32 %v409, %v412
      %v415 = vrcp.pop %v414
      %v416 = vmul.f32 1.0, %v415
      %v417 = vmul.f32 %v409, %v416
      %v418 = vmul.f32 %v409, %v412
      %v419 = vmul.f32 %v418, %v416
      %v420 = vmul.f32 %v419, %v416
      %v421 = vadd.f32 %v414, 1.0
      %v422 = vrcp.pop %v421
      %v423 = vmul.f32 %v420, %v422
      %v424 = vrsqrt.pop %v423
      %v425 = vmul.f32 %v423, %v424
      %vm426 = vcmp.eq.f32.partialorder %v423, inf
      %v427 = vsel %vm426, %v423, %v425
      %vm428 = vcmp.eq.f32.partialorder %v423, 0.0
      %v429 = vand.u32 %v423, 2147483648
      %v430 = vsel %vm428, %v429, %v427
      %v431 = vlaneseq
      %v432 = vand.u32 %v431, 127
      %vm433 = vcmp.eq.s32.totalorder %v432, 0
      %vm434 = vcmp.eq.s32.totalorder %v432, 1
      %vm435 = vcmp.eq.s32.totalorder %v432, 2
      %436 = vset.pattern.permute.xlu0 1
      %437 = vperm.xlu0 %436, %v409
      %v438 = vpop.permute.xlu0 %437
      %441 = vset.pattern.permute.xlu0 0
      %442 = vperm.xlu0 %441, %v430
      %v443 = vpop.permute.xlu0 %442
      %v445 = vsel %vm435, %v438, %v443
      %446 = vset.pattern.permute.xlu0 0
      %447 = vperm.xlu0 %446, %v409
      %v448 = vpop.permute.xlu0 %447
      %v450 = vsel %vm434, %v448, %v445
      %452 = vset.pattern.permute.xlu0 0
      %453 = vperm.xlu0 %452, %v417
      %v454 = vpop.permute.xlu0 %453
      %v456 = vsel %vm433, %v454, %v450
      %vm457 = vcmask 31744
      %458 = vst.msk [vmem:[%s219] sm:$0xff] %vm457, %v456
      %p459 = scmp.lt.s32.totalorder %s16, 1
      %s460 = scalar_select %p459, %s16, 1
      %s461 = smul.addr %s460, 8
      %s462 = scalar_lea.vmem %s5, %s461
      // Predicated region
      $region41: #{tpu_custom_call.1} parent=39 // pred_check
        %p463 = pneg %p144
      $region42: #{tpu_custom_call.1} parent=39 // pred_check_branch
        %465 = sbr.rel (%p463) target = $region44
      $region43: #{tpu_custom_call.1} parent=39 // pred_region
        _
      $region44: #{tpu_custom_call.1} parent=39 // pred_fallthru
        _
    $region40: #{tpu_custom_call.1} parent=5 // pred_fallthru
      _
    %p466 = scmp.le.s32.totalorder 2, %s11
    // Predicated region
    $region45: #{tpu_custom_call.1} parent=5 // pred_check
      %p467 = pneg %p466
    $region46: #{tpu_custom_call.1} parent=5 // pred_check_branch
      %469 = sbr.rel (%p467) target = $region48
    $region47: #{tpu_custom_call.1} parent=5 // pred_region
      %s470 = ssub.s32 %s11, 2
      // Predicated region
      $region49: #{tpu_custom_call.1} parent=47 // pred_check
        %p471 = pneg %p150
      $region50: #{tpu_custom_call.1} parent=47 // pred_check_branch
        %473 = sbr.rel (%p471) target = $region52
      $region51: #{tpu_custom_call.1} parent=47 // pred_region
        %p474 = scmp.lt.s32.totalorder %s17, 1
        %s475 = scalar_select %p474, %s17, 1
        %s476 = smul.addr %s475, 8
        %s477 = scalar_lea.vmem %s5, %s476
      $region52: #{tpu_custom_call.1} parent=47 // pred_fallthru
        _
    $region48: #{tpu_custom_call.1} parent=5 // pred_fallthru
      _
  $region6: #{tpu_custom_call.1} parent=0 // loop_footer
    %s15 = sadd.s32 1, %s11
  $region7: #{tpu_custom_call.1} parent=0 // loop_footer_branch
    %10 = sbr.rel target = $region3
  $region8: #{tpu_custom_call.1} parent=0 // loop_exit
    _

</llo_original>
